<compile_context>
chip_gen: v7x
topology: tpu7x:2x2x1
jax: 0.10.0
libtpu: 0.0.40
codegen_flags: <defaults>
</compile_context>

<pallas_src>
import functools

import jax
import jax.numpy as jnp
from jax import lax
from jax.experimental import pallas as pl
from jax.experimental.pallas import tpu as pltpu

EPS = 1e-5


# --------------------------------------------------------------------------------------
# In-kernel conv building blocks
# --------------------------------------------------------------------------------------
def _tap_input(x, halo, s, pad):
    """Shifted input window for tap offset `s` on one (C_in, Lt) tile (L on lanes).

    halo: (C_in, 2*pad) = [left halo cols | right halo cols] taken from the neighbouring
    L tiles (zeros at the true sequence edges == 'same' zero padding).
    """
    c_in, lt = x.shape
    if s == 0:
        return x
    xs = pltpu.roll(x, shift=(-s) % lt, axis=1)              # XLU lane rotate (free slot)
    lane = lax.broadcasted_iota(jnp.int32, (c_in, lt), 1)
    if s > 0:                                                 # tail s lanes <- right halo
        for j in range(s):
            col = halo[:, pad + j:pad + j + 1]                # (C_in, 1)
            xs = jnp.where(lane == (lt - s + j), col, xs)
    else:                                                     # head -s lanes <- left halo
        for j in range(-s):
            col = halo[:, pad + s + j:pad + s + j + 1]
            xs = jnp.where(lane == j, col, xs)
    return xs


def _conv_tile(x, halo, w_ref, *, K, pad, use_mxu, mm_dtype):
    """Conv1d ('same', stride=1) on one (C_in, Lt) tile -> (C_out, Lt) float32.

    w_ref: (K, C_out, C_in) tap-major weights (already cast to mm_dtype in the wrapper).
    K taps are accumulated into one fp32 accumulator (no (K*C_in, Lt) tap stack).
    """
    c_in, lt = x.shape
    c_out = w_ref.shape[1]
    acc = jnp.zeros((c_out, lt), jnp.float32)
    if use_mxu:
        for k in range(K):                                    # static unroll over taps
            xs = _tap_input(x, halo, k - pad, pad).astype(mm_dtype)
            acc = acc + jnp.dot(w_ref[k], xs, preferred_element_type=jnp.float32)
    else:
        # Tiny contraction: do the conv as K*C_in broadcast-FMAs on the VPU.
        w_all = w_ref[...]                                    # (K, C_out, C_in) fp32
        for k in range(K):
            xs = _tap_input(x, halo, k - pad, pad).astype(jnp.float32)
            for i in range(c_in):
                acc = acc + w_all[k, :, i:i + 1] * xs[i:i + 1, :]
    return acc


# --------------------------------------------------------------------------------------
# Kernels
# --------------------------------------------------------------------------------------
def _stats_kernel(x_ref, halo_ref, w_ref, stats_ref, *, K, pad, use_mxu, mm_dtype):
    """Pass 1: accumulate per-channel sum / sum-of-squares of the conv output."""
    @pl.when((pl.program_id(1) == 0) & (pl.program_id(2) == 0))
    def _init():
        stats_ref[...] = jnp.zeros_like(stats_ref)

    conv = _conv_tile(x_ref[0], halo_ref[0, 0], w_ref,
                      K=K, pad=pad, use_mxu=use_mxu, mm_dtype=mm_dtype)
    s = jnp.sum(conv, axis=1, keepdims=True)                  # (C_out, 1)
    ss = jnp.sum(conv * conv, axis=1, keepdims=True)          # (C_out, 1)
    stats_ref[0] = stats_ref[0] + jnp.concatenate([s, ss], axis=1)


def _apply_kernel(x_ref, halo_ref, w_ref, affine_ref, o_ref, *, K, pad, use_mxu, mm_dtype):
    """Pass 2: conv -> folded-BN affine -> ReLU -> + residual, lane-dense store."""
    x = x_ref[0]                                              # (C_in, Lt)
    conv = _conv_tile(x, halo_ref[0, 0], w_ref,
                      K=K, pad=pad, use_mxu=use_mxu, mm_dtype=mm_dtype)
    y = conv * affine_ref[:, 0:1] + affine_ref[:, 1:2]        # folded BN affine
    y = jnp.maximum(y, 0.0) + x.astype(jnp.float32)           # ReLU + residual
    o_ref[0] = y.astype(o_ref.dtype)


# --------------------------------------------------------------------------------------
# Wrapper-side sizing helpers
# --------------------------------------------------------------------------------------
def _vmem_limit_bytes():
    try:
        cap = int(pltpu.get_tpu_info().vmem_capacity_bytes)
    except Exception:
        cap = 128 * 1024 * 1024
    if cap >= 128 * 1024 * 1024:          # v5e / v6e (128 MiB): plenty of headroom
        return 64 * 1024 * 1024
    return 44 * 1024 * 1024               # v7x (64 MiB physical): leave headroom


def _choose_l_tile(L, c_in, c_out, itemsize, vmem_budget):
    """Largest lane tile (multiple of 128, dividing L) that fits the VMEM budget."""
    # Per-lane bytes of one grid step: double-buffered in/out tiles + fp32 accumulator
    # and shifted-tap temporaries.
    per_lane = (2 * c_in + 2 * c_out) * itemsize + 4 * (3 * c_out + 2 * c_in)
    cap = (vmem_budget // 2) // max(per_lane, 1)
    cap = int(min(max(cap, 128), 2048))
    if L <= cap:
        return L
    t = (cap // 128) * 128
    while t >= 128:
        if L % t == 0:
            return t
        t -= 128
    # TODO(synk): L has no 128-multiple divisor below the VMEM cap; a masked partial
    # last tile would be needed — fall back to a single whole-L tile.
    return L


def _build_halo(x, l_tile, pad):
    """(N, nLt, C, max(2*pad,1)) halo columns per L tile (zeros at sequence edges)."""
    N, C, L = x.shape
    n_lt = L // l_tile
    hw = max(2 * pad, 1)
    if n_lt == 1 or pad == 0:
        return jnp.zeros((N, n_lt, C, hw), x.dtype)
    xb = x.reshape(N, C, n_lt, l_tile)
    z = jnp.zeros((N, C, 1, pad), x.dtype)
    left = jnp.concatenate([z, xb[:, :, :-1, l_tile - pad:]], axis=2)   # tail of tile l-1
    right = jnp.concatenate([xb[:, :, 1:, :pad], z], axis=2)            # head of tile l+1
    halo = jnp.concatenate([left, right], axis=3)                        # (N, C, nLt, 2p)
    return jnp.transpose(halo, (0, 2, 1, 3))                             # (N, nLt, C, 2p)


# --------------------------------------------------------------------------------------
# Public entry point
# --------------------------------------------------------------------------------------
def residual1d_block(x, weight, bias=None, gamma=None, beta=None, *,
                     padding=2, eps=EPS, l_tile=None, use_bf16_matmul=False):
    """x: (N, C, L); weight: (C_out, C_in, K) in PyTorch Conv1d layout. Returns (N, C, L)."""
    N, C_in, L = x.shape
    C_out, _, K = weight.shape
    assert K == 2 * padding + 1, "only 'same' conv (K == 2*padding + 1) is supported"
    if gamma is None:
        gamma = jnp.ones((C_out,), jnp.float32)
    if beta is None:
        beta = jnp.zeros((C_out,), jnp.float32)
    # Conv bias is exactly cancelled by the training-mode batch-mean subtraction.
    del bias

    # MXU vs VPU conv path (review: tiny contractions under-fill the systolic array).
    use_mxu = (K * C_in) >= 64
    if use_mxu:
        mm_dtype = jnp.bfloat16 if use_bf16_matmul else x.dtype
    else:
        mm_dtype = jnp.float32
    # Tap-major weights, cast ONCE here (no per-step cast inside the kernel).
    w_taps = jnp.transpose(weight, (2, 0, 1)).astype(mm_dtype)        # (K, C_out, C_in)

    vmem_limit = _vmem_limit_bytes()
    if l_tile is None:
        l_tile = _choose_l_tile(L, C_in, C_out, x.dtype.itemsize, vmem_limit)
    assert L % l_tile == 0, "l_tile must divide L"
    assert l_tile == L or l_tile % 128 == 0, "l_tile must be a multiple of 128 (or == L)"
    n_lt = L // l_tile
    halo = _build_halo(x, l_tile, padding)
    hw = halo.shape[-1]

    conv_flops = 2 * N * C_out * C_in * K * L
    bytes_x = int(x.size) * x.dtype.itemsize

    def cparams(sem):
        return pltpu.CompilerParams(dimension_semantics=sem,
                                    vmem_limit_bytes=vmem_limit)

    # ---- Pass 1: per-channel sum / sum-of-squares of the conv output ----------------
    # Outer "parallel" axis G lets v7x's two TensorCores split the stats pass; the
    # per-slice partial stats are reduced in the tiny JAX epilogue below.
    G = 2 if (N >= 2 and N % 2 == 0) else 1
    NG = N // G

    def _x_map1(g, n, l):
        return (g * NG + n, 0, l)

    def _halo_map1(g, n, l):
        return (g * NG + n, l, 0, 0)

    stats = pl.pallas_call(
        functools.partial(_stats_kernel, K=K, pad=padding,
                          use_mxu=use_mxu, mm_dtype=mm_dtype),
        out_shape=jax.ShapeDtypeStruct((G, C_out, 2), jnp.float32),
        grid=(G, NG, n_lt),
        in_specs=[
            pl.BlockSpec((1, C_in, l_tile), _x_map1),
            pl.BlockSpec((1, 1, C_in, hw), _halo_map1),
            pl.BlockSpec((K, C_out, C_in), lambda g, n, l: (0, 0, 0)),
        ],
        out_specs=pl.BlockSpec((1, C_out, 2), lambda g, n, l: (g, 0, 0)),
        compiler_params=cparams(("parallel", "arbitrary", "arbitrary")),
        cost_estimate=pl.CostEstimate(flops=conv_flops + 3 * N * C_out * L,
                                      transcendentals=0, bytes_accessed=bytes_x),
    )(x, halo, w_taps)
    stats = jnp.sum(stats, axis=0)                                     # (C_out, 2)

    # Fold batch stats + gamma/beta into one per-channel affine (tiny (C,) math).
    cnt = jnp.float32(N * L)
    mean = stats[:, 0] / cnt
    # NOTE: single-pass E[x^2]-E[x]^2 in fp32 — fine for moderate N*L; a Welford /
    # two-pass variant would be preferable for very large N*L with large activations.
    var = jnp.maximum(stats[:, 1] / cnt - mean * mean, 0.0)
    inv = lax.rsqrt(var + eps)
    g32 = gamma.astype(jnp.float32)
    scale = g32 * inv
    shift = beta.astype(jnp.float32) - mean * scale
    affine = jnp.stack([scale, shift], axis=1)                          # (C_out, 2)

    # ---- Pass 2: recompute conv, normalize, ReLU, add residual, store ---------------
    out = pl.pallas_call(
        functools.partial(_apply_kernel, K=K, pad=padding,
                          use_mxu=use_mxu, mm_dtype=mm_dtype),
        out_shape=jax.ShapeDtypeStruct((N, C_out, L), x.dtype),
        grid=(N, n_lt),
        in_specs=[
            pl.BlockSpec((1, C_in, l_tile), lambda n, l: (n, 0, l)),
            pl.BlockSpec((1, 1, C_in, hw), lambda n, l: (n, l, 0, 0)),
            pl.BlockSpec((K, C_out, C_in), lambda n, l: (0, 0, 0)),
            pl.BlockSpec((C_out, 2), lambda n, l: (0, 0)),
        ],
        out_specs=pl.BlockSpec((1, C_out, l_tile), lambda n, l: (n, 0, l)),
        compiler_params=cparams(("parallel", "parallel")),
        cost_estimate=pl.CostEstimate(flops=conv_flops + 4 * N * C_out * L,
                                      transcendentals=0, bytes_accessed=2 * bytes_x),
    )(x, halo, w_taps, affine)
    return out


# --------------------------------------------------------------------------------------
# Reference + tests
# --------------------------------------------------------------------------------------
def _reference(x_ncl, w_oik, bias, gamma, beta, *, pad=2):
    """Pure-JAX reference reproducing the PyTorch forward (training-mode BN)."""
    conv = lax.conv_general_dilated(
        x_ncl, w_oik, window_strides=(1,), padding=[(pad, pad)],
        dimension_numbers=('NCH', 'OIH', 'NCH'))
    conv = conv + bias[None, :, None]
    mean = conv.mean(axis=(0, 2), keepdims=True)
    var = ((conv - mean) ** 2).mean(axis=(0, 2), keepdims=True)
    xhat = (conv - mean) / jnp.sqrt(var + EPS)
    y = xhat * gamma[None, :, None] + beta[None, :, None]
    return jnp.maximum(y, 0.0) + x_ncl


def _run_case(N, C, L, K, pad, *, l_tile=None, tol=1e-4):
    key = jax.random.PRNGKey(0)
    kx, kw, kb, kg, kbt = jax.random.split(key, 5)
    x = jax.random.normal(kx, (N, C, L), dtype=jnp.float32)
    w = 0.1 * jax.random.normal(kw, (C, C, K), dtype=jnp.float32)     # (out, in, K)
    b = 0.1 * jax.random.normal(kb, (C,), dtype=jnp.float32)
    gamma = 1.0 + 0.1 * jax.random.normal(kg, (C,), dtype=jnp.float32)
    beta = 0.1 * jax.random.normal(kbt, (C,), dtype=jnp.float32)

    out = jax.block_until_ready(
        residual1d_block(x, w, b, gamma, beta, padding=pad, l_tile=l_tile))
    ref = _reference(x, w, b, gamma, beta, pad=pad)
    assert out.shape == (N, C, L)
    err = float(jnp.max(jnp.abs(out - ref)))
    assert jnp.allclose(out, ref, atol=tol, rtol=tol), \
        f"mismatch (N={N}, C={C}, L={L}, l_tile={l_tile}): max abs err {err}"


if __name__ == "__main__":
    # Small case (module defaults): tiny contraction -> VPU conv path, single L tile.
    _run_case(2, 8, 16, 5, 2)
    # Moderate case: MXU path, L tiled into two 256-lane tiles (exercises the cross-tile
    # halo) and the (parallel, arbitrary, arbitrary) split of the stats pass.
    _run_case(2, 64, 512, 5, 2, l_tile=256, tol=1e-3)
    print("KERNEL_OK")
</pallas_src>

<mosaic_0001>
module attributes {stable_mosaic.version = 11 : i64} {
  func.func @_stats_kernel(%arg0: i32, %arg1: i32, %arg2: i32, %arg3: memref<1x8x16xf32, #tpu.memory_space<vmem>>, %arg4: memref<1x1x8x4xf32, #tpu.memory_space<vmem>>, %arg5: memref<5x8x8xf32, #tpu.memory_space<vmem>>, %arg6: memref<1x8x2xf32, #tpu.memory_space<vmem>>) attributes {dimension_semantics = [#tpu.dimension_semantics<parallel>, #tpu.dimension_semantics<arbitrary>, #tpu.dimension_semantics<arbitrary>], iteration_bounds = array<i64: 2, 1, 1>, scalar_prefetch = 0 : i64, scratch_operands = 0 : i64, tpu.core_type = #tpu.core_type<tc>, window_params = [{transform_indices = @transform_0, window_bounds = array<i64: 1, 8, 16>}, {transform_indices = @transform_1, window_bounds = array<i64: 1, 1, 8, 4>}, {pipeline_mode = #tpu.pipeline_mode<synchronous>, transform_indices = @transform_2, window_bounds = array<i64: 5, 8, 8>}, {transform_indices = @transform_3, window_bounds = array<i64: 1, 8, 2>}]} {
    %c0_i32 = arith.constant 0 : i32
    %0 = arith.cmpi eq, %arg1, %c0_i32 : i32
    %c0_i32_0 = arith.constant 0 : i32
    %1 = arith.cmpi eq, %arg2, %c0_i32_0 : i32
    %2 = arith.andi %0, %1 : i1
    %3 = arith.extui %2 : i1 to i32
    %c0_i32_1 = arith.constant 0 : i32
    %4 = arith.cmpi ne, %3, %c0_i32_1 : i32
    scf.if %4 {
      %cst_25 = arith.constant 0.000000e+00 : f32
      %347 = vector.broadcast %cst_25 : f32 to vector<1x8x2xf32>
      %c0_26 = arith.constant 0 : index
      %c0_27 = arith.constant 0 : index
      %c0_28 = arith.constant 0 : index
      %348 = vector.load %arg6[%c0_26, %c0_27, %c0_28] : memref<1x8x2xf32, #tpu.memory_space<vmem>>, vector<1x8x2xf32>
      tpu.vector_store %arg6[%c0_26, %c0_27, %c0_28], %347 {strides = array<i32>} : memref<1x8x2xf32, #tpu.memory_space<vmem>>, vector<1x8x2xf32>,
    } else {
    }
    %c0 = arith.constant 0 : index
    %c0_2 = arith.constant 0 : index
    %c0_3 = arith.constant 0 : index
    %5 = vector.load %arg3[%c0, %c0_2, %c0_3] : memref<1x8x16xf32, #tpu.memory_space<vmem>>, vector<1x8x16xf32>
    %6 = vector.shape_cast %5 : vector<1x8x16xf32> to vector<8x16xf32>
    %c0_4 = arith.constant 0 : index
    %c0_5 = arith.constant 0 : index
    %c0_6 = arith.constant 0 : index
    %c0_7 = arith.constant 0 : index
    %7 = vector.load %arg4[%c0_4, %c0_5, %c0_6, %c0_7] : memref<1x1x8x4xf32, #tpu.memory_space<vmem>>, vector<1x1x8x4xf32>
    %8 = vector.shape_cast %7 : vector<1x1x8x4xf32> to vector<8x4xf32>
    %cst = arith.constant 0.000000e+00 : f32
    %9 = vector.broadcast %cst : f32 to vector<8x16xf32>
    %c0_8 = arith.constant 0 : index
    %c0_9 = arith.constant 0 : index
    %c0_10 = arith.constant 0 : index
    %10 = vector.load %arg5[%c0_8, %c0_9, %c0_10] : memref<5x8x8xf32, #tpu.memory_space<vmem>>, vector<5x8x8xf32>
    %c2_i32 = arith.constant 2 : i32
    %11 = tpu.dynamic_rotate %6 by %c2_i32 dim 1 : vector<8x16xf32>, i32 -> vector<8x16xf32>
    %12 = tpu.iota {dimensions = array<i32: 1>} : vector<8x16xi32>
    %13 = vector.extract_strided_slice %8 {offsets = [0, 0], sizes = [8, 1], strides = [1, 1]} : vector<8x4xf32> to vector<8x1xf32>
    %c0_i32_11 = arith.constant 0 : i32
    %14 = vector.broadcast %c0_i32_11 : i32 to vector<8x16xi32>
    %15 = arith.cmpi eq, %12, %14 : vector<8x16xi32>
    %16 = vector.shape_cast %13 : vector<8x1xf32> to vector<8x1xf32>
    %17 = vector.broadcast %16 : vector<8x1xf32> to vector<8x16xf32>
    %18 = arith.select %15, %17, %11 : vector<8x16xi1>, vector<8x16xf32>
    %19 = vector.extract_strided_slice %8 {offsets = [0, 1], sizes = [8, 1], strides = [1, 1]} : vector<8x4xf32> to vector<8x1xf32>
    %c1_i32 = arith.constant 1 : i32
    %20 = vector.broadcast %c1_i32 : i32 to vector<8x16xi32>
    %21 = arith.cmpi eq, %12, %20 : vector<8x16xi32>
    %22 = vector.shape_cast %19 : vector<8x1xf32> to vector<8x1xf32>
    %23 = vector.broadcast %22 : vector<8x1xf32> to vector<8x16xf32>
    %24 = arith.select %21, %23, %18 : vector<8x16xi1>, vector<8x16xf32>
    %25 = vector.extract_strided_slice %10 {offsets = [0, 0, 0], sizes = [1, 8, 1], strides = [1, 1, 1]} : vector<5x8x8xf32> to vector<1x8x1xf32>
    %26 = vector.shape_cast %25 : vector<1x8x1xf32> to vector<8x1xf32>
    %27 = vector.extract_strided_slice %24 {offsets = [0, 0], sizes = [1, 16], strides = [1, 1]} : vector<8x16xf32> to vector<1x16xf32>
    %28 = vector.broadcast %26 : vector<8x1xf32> to vector<8x16xf32>
    %29 = vector.broadcast %27 : vector<1x16xf32> to vector<8x16xf32>
    %30 = arith.mulf %28, %29 : vector<8x16xf32>
    %31 = arith.addf %9, %30 : vector<8x16xf32>
    %32 = vector.extract_strided_slice %10 {offsets = [0, 0, 1], sizes = [1, 8, 1], strides = [1, 1, 1]} : vector<5x8x8xf32> to vector<1x8x1xf32>
    %33 = vector.shape_cast %32 : vector<1x8x1xf32> to vector<8x1xf32>
    %34 = vector.extract_strided_slice %24 {offsets = [1, 0], sizes = [1, 16], strides = [1, 1]} : vector<8x16xf32> to vector<1x16xf32>
    %35 = vector.broadcast %33 : vector<8x1xf32> to vector<8x16xf32>
    %36 = vector.broadcast %34 : vector<1x16xf32> to vector<8x16xf32>
    %37 = arith.mulf %35, %36 : vector<8x16xf32>
    %38 = arith.addf %31, %37 : vector<8x16xf32>
    %39 = vector.extract_strided_slice %10 {offsets = [0, 0, 2], sizes = [1, 8, 1], strides = [1, 1, 1]} : vector<5x8x8xf32> to vector<1x8x1xf32>
    %40 = vector.shape_cast %39 : vector<1x8x1xf32> to vector<8x1xf32>
    %41 = vector.extract_strided_slice %24 {offsets = [2, 0], sizes = [1, 16], strides = [1, 1]} : vector<8x16xf32> to vector<1x16xf32>
    %42 = vector.broadcast %40 : vector<8x1xf32> to vector<8x16xf32>
    %43 = vector.broadcast %41 : vector<1x16xf32> to vector<8x16xf32>
    %44 = arith.mulf %42, %43 : vector<8x16xf32>
    %45 = arith.addf %38, %44 : vector<8x16xf32>
    %46 = vector.extract_strided_slice %10 {offsets = [0, 0, 3], sizes = [1, 8, 1], strides = [1, 1, 1]} : vector<5x8x8xf32> to vector<1x8x1xf32>
    %47 = vector.shape_cast %46 : vector<1x8x1xf32> to vector<8x1xf32>
    %48 = vector.extract_strided_slice %24 {offsets = [3, 0], sizes = [1, 16], strides = [1, 1]} : vector<8x16xf32> to vector<1x16xf32>
    %49 = vector.broadcast %47 : vector<8x1xf32> to vector<8x16xf32>
    %50 = vector.broadcast %48 : vector<1x16xf32> to vector<8x16xf32>
    %51 = arith.mulf %49, %50 : vector<8x16xf32>
    %52 = arith.addf %45, %51 : vector<8x16xf32>
    %53 = vector.extract_strided_slice %10 {offsets = [0, 0, 4], sizes = [1, 8, 1], strides = [1, 1, 1]} : vector<5x8x8xf32> to vector<1x8x1xf32>
    %54 = vector.shape_cast %53 : vector<1x8x1xf32> to vector<8x1xf32>
    %55 = vector.extract_strided_slice %24 {offsets = [4, 0], sizes = [1, 16], strides = [1, 1]} : vector<8x16xf32> to vector<1x16xf32>
    %56 = vector.broadcast %54 : vector<8x1xf32> to vector<8x16xf32>
    %57 = vector.broadcast %55 : vector<1x16xf32> to vector<8x16xf32>
    %58 = arith.mulf %56, %57 : vector<8x16xf32>
    %59 = arith.addf %52, %58 : vector<8x16xf32>
    %60 = vector.extract_strided_slice %10 {offsets = [0, 0, 5], sizes = [1, 8, 1], strides = [1, 1, 1]} : vector<5x8x8xf32> to vector<1x8x1xf32>
    %61 = vector.shape_cast %60 : vector<1x8x1xf32> to vector<8x1xf32>
    %62 = vector.extract_strided_slice %24 {offsets = [5, 0], sizes = [1, 16], strides = [1, 1]} : vector<8x16xf32> to vector<1x16xf32>
    %63 = vector.broadcast %61 : vector<8x1xf32> to vector<8x16xf32>
    %64 = vector.broadcast %62 : vector<1x16xf32> to vector<8x16xf32>
    %65 = arith.mulf %63, %64 : vector<8x16xf32>
    %66 = arith.addf %59, %65 : vector<8x16xf32>
    %67 = vector.extract_strided_slice %10 {offsets = [0, 0, 6], sizes = [1, 8, 1], strides = [1, 1, 1]} : vector<5x8x8xf32> to vector<1x8x1xf32>
    %68 = vector.shape_cast %67 : vector<1x8x1xf32> to vector<8x1xf32>
    %69 = vector.extract_strided_slice %24 {offsets = [6, 0], sizes = [1, 16], strides = [1, 1]} : vector<8x16xf32> to vector<1x16xf32>
    %70 = vector.broadcast %68 : vector<8x1xf32> to vector<8x16xf32>
    %71 = vector.broadcast %69 : vector<1x16xf32> to vector<8x16xf32>
    %72 = arith.mulf %70, %71 : vector<8x16xf32>
    %73 = arith.addf %66, %72 : vector<8x16xf32>
    %74 = vector.extract_strided_slice %10 {offsets = [0, 0, 7], sizes = [1, 8, 1], strides = [1, 1, 1]} : vector<5x8x8xf32> to vector<1x8x1xf32>
    %75 = vector.shape_cast %74 : vector<1x8x1xf32> to vector<8x1xf32>
    %76 = vector.extract_strided_slice %24 {offsets = [7, 0], sizes = [1, 16], strides = [1, 1]} : vector<8x16xf32> to vector<1x16xf32>
    %77 = vector.broadcast %75 : vector<8x1xf32> to vector<8x16xf32>
    %78 = vector.broadcast %76 : vector<1x16xf32> to vector<8x16xf32>
    %79 = arith.mulf %77, %78 : vector<8x16xf32>
    %80 = arith.addf %73, %79 : vector<8x16xf32>
    %c1_i32_12 = arith.constant 1 : i32
    %81 = tpu.dynamic_rotate %6 by %c1_i32_12 dim 1 : vector<8x16xf32>, i32 -> vector<8x16xf32>
    %82 = tpu.iota {dimensions = array<i32: 1>} : vector<8x16xi32>
    %83 = vector.extract_strided_slice %8 {offsets = [0, 1], sizes = [8, 1], strides = [1, 1]} : vector<8x4xf32> to vector<8x1xf32>
    %c0_i32_13 = arith.constant 0 : i32
    %84 = vector.broadcast %c0_i32_13 : i32 to vector<8x16xi32>
    %85 = arith.cmpi eq, %82, %84 : vector<8x16xi32>
    %86 = vector.shape_cast %83 : vector<8x1xf32> to vector<8x1xf32>
    %87 = vector.broadcast %86 : vector<8x1xf32> to vector<8x16xf32>
    %88 = arith.select %85, %87, %81 : vector<8x16xi1>, vector<8x16xf32>
    %89 = vector.extract_strided_slice %10 {offsets = [1, 0, 0], sizes = [1, 8, 1], strides = [1, 1, 1]} : vector<5x8x8xf32> to vector<1x8x1xf32>
    %90 = vector.shape_cast %89 : vector<1x8x1xf32> to vector<8x1xf32>
    %91 = vector.extract_strided_slice %88 {offsets = [0, 0], sizes = [1, 16], strides = [1, 1]} : vector<8x16xf32> to vector<1x16xf32>
    %92 = vector.broadcast %90 : vector<8x1xf32> to vector<8x16xf32>
    %93 = vector.broadcast %91 : vector<1x16xf32> to vector<8x16xf32>
    %94 = arith.mulf %92, %93 : vector<8x16xf32>
    %95 = arith.addf %80, %94 : vector<8x16xf32>
    %96 = vector.extract_strided_slice %10 {offsets = [1, 0, 1], sizes = [1, 8, 1], strides = [1, 1, 1]} : vector<5x8x8xf32> to vector<1x8x1xf32>
    %97 = vector.shape_cast %96 : vector<1x8x1xf32> to vector<8x1xf32>
    %98 = vector.extract_strided_slice %88 {offsets = [1, 0], sizes = [1, 16], strides = [1, 1]} : vector<8x16xf32> to vector<1x16xf32>
    %99 = vector.broadcast %97 : vector<8x1xf32> to vector<8x16xf32>
    %100 = vector.broadcast %98 : vector<1x16xf32> to vector<8x16xf32>
    %101 = arith.mulf %99, %100 : vector<8x16xf32>
    %102 = arith.addf %95, %101 : vector<8x16xf32>
    %103 = vector.extract_strided_slice %10 {offsets = [1, 0, 2], sizes = [1, 8, 1], strides = [1, 1, 1]} : vector<5x8x8xf32> to vector<1x8x1xf32>
    %104 = vector.shape_cast %103 : vector<1x8x1xf32> to vector<8x1xf32>
    %105 = vector.extract_strided_slice %88 {offsets = [2, 0], sizes = [1, 16], strides = [1, 1]} : vector<8x16xf32> to vector<1x16xf32>
    %106 = vector.broadcast %104 : vector<8x1xf32> to vector<8x16xf32>
    %107 = vector.broadcast %105 : vector<1x16xf32> to vector<8x16xf32>
    %108 = arith.mulf %106, %107 : vector<8x16xf32>
    %109 = arith.addf %102, %108 : vector<8x16xf32>
    %110 = vector.extract_strided_slice %10 {offsets = [1, 0, 3], sizes = [1, 8, 1], strides = [1, 1, 1]} : vector<5x8x8xf32> to vector<1x8x1xf32>
    %111 = vector.shape_cast %110 : vector<1x8x1xf32> to vector<8x1xf32>
    %112 = vector.extract_strided_slice %88 {offsets = [3, 0], sizes = [1, 16], strides = [1, 1]} : vector<8x16xf32> to vector<1x16xf32>
    %113 = vector.broadcast %111 : vector<8x1xf32> to vector<8x16xf32>
    %114 = vector.broadcast %112 : vector<1x16xf32> to vector<8x16xf32>
    %115 = arith.mulf %113, %114 : vector<8x16xf32>
    %116 = arith.addf %109, %115 : vector<8x16xf32>
    %117 = vector.extract_strided_slice %10 {offsets = [1, 0, 4], sizes = [1, 8, 1], strides = [1, 1, 1]} : vector<5x8x8xf32> to vector<1x8x1xf32>
    %118 = vector.shape_cast %117 : vector<1x8x1xf32> to vector<8x1xf32>
    %119 = vector.extract_strided_slice %88 {offsets = [4, 0], sizes = [1, 16], strides = [1, 1]} : vector<8x16xf32> to vector<1x16xf32>
    %120 = vector.broadcast %118 : vector<8x1xf32> to vector<8x16xf32>
    %121 = vector.broadcast %119 : vector<1x16xf32> to vector<8x16xf32>
    %122 = arith.mulf %120, %121 : vector<8x16xf32>
    %123 = arith.addf %116, %122 : vector<8x16xf32>
    %124 = vector.extract_strided_slice %10 {offsets = [1, 0, 5], sizes = [1, 8, 1], strides = [1, 1, 1]} : vector<5x8x8xf32> to vector<1x8x1xf32>
    %125 = vector.shape_cast %124 : vector<1x8x1xf32> to vector<8x1xf32>
    %126 = vector.extract_strided_slice %88 {offsets = [5, 0], sizes = [1, 16], strides = [1, 1]} : vector<8x16xf32> to vector<1x16xf32>
    %127 = vector.broadcast %125 : vector<8x1xf32> to vector<8x16xf32>
    %128 = vector.broadcast %126 : vector<1x16xf32> to vector<8x16xf32>
    %129 = arith.mulf %127, %128 : vector<8x16xf32>
    %130 = arith.addf %123, %129 : vector<8x16xf32>
    %131 = vector.extract_strided_slice %10 {offsets = [1, 0, 6], sizes = [1, 8, 1], strides = [1, 1, 1]} : vector<5x8x8xf32> to vector<1x8x1xf32>
    %132 = vector.shape_cast %131 : vector<1x8x1xf32> to vector<8x1xf32>
    %133 = vector.extract_strided_slice %88 {offsets = [6, 0], sizes = [1, 16], strides = [1, 1]} : vector<8x16xf32> to vector<1x16xf32>
    %134 = vector.broadcast %132 : vector<8x1xf32> to vector<8x16xf32>
    %135 = vector.broadcast %133 : vector<1x16xf32> to vector<8x16xf32>
    %136 = arith.mulf %134, %135 : vector<8x16xf32>
    %137 = arith.addf %130, %136 : vector<8x16xf32>
    %138 = vector.extract_strided_slice %10 {offsets = [1, 0, 7], sizes = [1, 8, 1], strides = [1, 1, 1]} : vector<5x8x8xf32> to vector<1x8x1xf32>
    %139 = vector.shape_cast %138 : vector<1x8x1xf32> to vector<8x1xf32>
    %140 = vector.extract_strided_slice %88 {offsets = [7, 0], sizes = [1, 16], strides = [1, 1]} : vector<8x16xf32> to vector<1x16xf32>
    %141 = vector.broadcast %139 : vector<8x1xf32> to vector<8x16xf32>
    %142 = vector.broadcast %140 : vector<1x16xf32> to vector<8x16xf32>
    %143 = arith.mulf %141, %142 : vector<8x16xf32>
    %144 = arith.addf %137, %143 : vector<8x16xf32>
    %145 = vector.extract_strided_slice %10 {offsets = [2, 0, 0], sizes = [1, 8, 1], strides = [1, 1, 1]} : vector<5x8x8xf32> to vector<1x8x1xf32>
    %146 = vector.shape_cast %145 : vector<1x8x1xf32> to vector<8x1xf32>
    %147 = vector.extract_strided_slice %6 {offsets = [0, 0], sizes = [1, 16], strides = [1, 1]} : vector<8x16xf32> to vector<1x16xf32>
    %148 = vector.broadcast %146 : vector<8x1xf32> to vector<8x16xf32>
    %149 = vector.broadcast %147 : vector<1x16xf32> to vector<8x16xf32>
    %150 = arith.mulf %148, %149 : vector<8x16xf32>
    %151 = arith.addf %144, %150 : vector<8x16xf32>
    %152 = vector.extract_strided_slice %10 {offsets = [2, 0, 1], sizes = [1, 8, 1], strides = [1, 1, 1]} : vector<5x8x8xf32> to vector<1x8x1xf32>
    %153 = vector.shape_cast %152 : vector<1x8x1xf32> to vector<8x1xf32>
    %154 = vector.extract_strided_slice %6 {offsets = [1, 0], sizes = [1, 16], strides = [1, 1]} : vector<8x16xf32> to vector<1x16xf32>
    %155 = vector.broadcast %153 : vector<8x1xf32> to vector<8x16xf32>
    %156 = vector.broadcast %154 : vector<1x16xf32> to vector<8x16xf32>
    %157 = arith.mulf %155, %156 : vector<8x16xf32>
    %158 = arith.addf %151, %157 : vector<8x16xf32>
    %159 = vector.extract_strided_slice %10 {offsets = [2, 0, 2], sizes = [1, 8, 1], strides = [1, 1, 1]} : vector<5x8x8xf32> to vector<1x8x1xf32>
    %160 = vector.shape_cast %159 : vector<1x8x1xf32> to vector<8x1xf32>
    %161 = vector.extract_strided_slice %6 {offsets = [2, 0], sizes = [1, 16], strides = [1, 1]} : vector<8x16xf32> to vector<1x16xf32>
    %162 = vector.broadcast %160 : vector<8x1xf32> to vector<8x16xf32>
    %163 = vector.broadcast %161 : vector<1x16xf32> to vector<8x16xf32>
    %164 = arith.mulf %162, %163 : vector<8x16xf32>
    %165 = arith.addf %158, %164 : vector<8x16xf32>
    %166 = vector.extract_strided_slice %10 {offsets = [2, 0, 3], sizes = [1, 8, 1], strides = [1, 1, 1]} : vector<5x8x8xf32> to vector<1x8x1xf32>
    %167 = vector.shape_cast %166 : vector<1x8x1xf32> to vector<8x1xf32>
    %168 = vector.extract_strided_slice %6 {offsets = [3, 0], sizes = [1, 16], strides = [1, 1]} : vector<8x16xf32> to vector<1x16xf32>
    %169 = vector.broadcast %167 : vector<8x1xf32> to vector<8x16xf32>
    %170 = vector.broadcast %168 : vector<1x16xf32> to vector<8x16xf32>
    %171 = arith.mulf %169, %170 : vector<8x16xf32>
    %172 = arith.addf %165, %171 : vector<8x16xf32>
    %173 = vector.extract_strided_slice %10 {offsets = [2, 0, 4], sizes = [1, 8, 1], strides = [1, 1, 1]} : vector<5x8x8xf32> to vector<1x8x1xf32>
    %174 = vector.shape_cast %173 : vector<1x8x1xf32> to vector<8x1xf32>
    %175 = vector.extract_strided_slice %6 {offsets = [4, 0], sizes = [1, 16], strides = [1, 1]} : vector<8x16xf32> to vector<1x16xf32>
    %176 = vector.broadcast %174 : vector<8x1xf32> to vector<8x16xf32>
    %177 = vector.broadcast %175 : vector<1x16xf32> to vector<8x16xf32>
    %178 = arith.mulf %176, %177 : vector<8x16xf32>
    %179 = arith.addf %172, %178 : vector<8x16xf32>
    %180 = vector.extract_strided_slice %10 {offsets = [2, 0, 5], sizes = [1, 8, 1], strides = [1, 1, 1]} : vector<5x8x8xf32> to vector<1x8x1xf32>
    %181 = vector.shape_cast %180 : vector<1x8x1xf32> to vector<8x1xf32>
    %182 = vector.extract_strided_slice %6 {offsets = [5, 0], sizes = [1, 16], strides = [1, 1]} : vector<8x16xf32> to vector<1x16xf32>
    %183 = vector.broadcast %181 : vector<8x1xf32> to vector<8x16xf32>
    %184 = vector.broadcast %182 : vector<1x16xf32> to vector<8x16xf32>
    %185 = arith.mulf %183, %184 : vector<8x16xf32>
    %186 = arith.addf %179, %185 : vector<8x16xf32>
    %187 = vector.extract_strided_slice %10 {offsets = [2, 0, 6], sizes = [1, 8, 1], strides = [1, 1, 1]} : vector<5x8x8xf32> to vector<1x8x1xf32>
    %188 = vector.shape_cast %187 : vector<1x8x1xf32> to vector<8x1xf32>
    %189 = vector.extract_strided_slice %6 {offsets = [6, 0], sizes = [1, 16], strides = [1, 1]} : vector<8x16xf32> to vector<1x16xf32>
    %190 = vector.broadcast %188 : vector<8x1xf32> to vector<8x16xf32>
    %191 = vector.broadcast %189 : vector<1x16xf32> to vector<8x16xf32>
    %192 = arith.mulf %190, %191 : vector<8x16xf32>
    %193 = arith.addf %186, %192 : vector<8x16xf32>
    %194 = vector.extract_strided_slice %10 {offsets = [2, 0, 7], sizes = [1, 8, 1], strides = [1, 1, 1]} : vector<5x8x8xf32> to vector<1x8x1xf32>
    %195 = vector.shape_cast %194 : vector<1x8x1xf32> to vector<8x1xf32>
    %196 = vector.extract_strided_slice %6 {offsets = [7, 0], sizes = [1, 16], strides = [1, 1]} : vector<8x16xf32> to vector<1x16xf32>
    %197 = vector.broadcast %195 : vector<8x1xf32> to vector<8x16xf32>
    %198 = vector.broadcast %196 : vector<1x16xf32> to vector<8x16xf32>
    %199 = arith.mulf %197, %198 : vector<8x16xf32>
    %200 = arith.addf %193, %199 : vector<8x16xf32>
    %c15_i32 = arith.constant 15 : i32
    %201 = tpu.dynamic_rotate %6 by %c15_i32 dim 1 : vector<8x16xf32>, i32 -> vector<8x16xf32>
    %202 = tpu.iota {dimensions = array<i32: 1>} : vector<8x16xi32>
    %203 = vector.extract_strided_slice %8 {offsets = [0, 2], sizes = [8, 1], strides = [1, 1]} : vector<8x4xf32> to vector<8x1xf32>
    %c15_i32_14 = arith.constant 15 : i32
    %204 = vector.broadcast %c15_i32_14 : i32 to vector<8x16xi32>
    %205 = arith.cmpi eq, %202, %204 : vector<8x16xi32>
    %206 = vector.shape_cast %203 : vector<8x1xf32> to vector<8x1xf32>
    %207 = vector.broadcast %206 : vector<8x1xf32> to vector<8x16xf32>
    %208 = arith.select %205, %207, %201 : vector<8x16xi1>, vector<8x16xf32>
    %209 = vector.extract_strided_slice %10 {offsets = [3, 0, 0], sizes = [1, 8, 1], strides = [1, 1, 1]} : vector<5x8x8xf32> to vector<1x8x1xf32>
    %210 = vector.shape_cast %209 : vector<1x8x1xf32> to vector<8x1xf32>
    %211 = vector.extract_strided_slice %208 {offsets = [0, 0], sizes = [1, 16], strides = [1, 1]} : vector<8x16xf32> to vector<1x16xf32>
    %212 = vector.broadcast %210 : vector<8x1xf32> to vector<8x16xf32>
    %213 = vector.broadcast %211 : vector<1x16xf32> to vector<8x16xf32>
    %214 = arith.mulf %212, %213 : vector<8x16xf32>
    %215 = arith.addf %200, %214 : vector<8x16xf32>
    %216 = vector.extract_strided_slice %10 {offsets = [3, 0, 1], sizes = [1, 8, 1], strides = [1, 1, 1]} : vector<5x8x8xf32> to vector<1x8x1xf32>
    %217 = vector.shape_cast %216 : vector<1x8x1xf32> to vector<8x1xf32>
    %218 = vector.extract_strided_slice %208 {offsets = [1, 0], sizes = [1, 16], strides = [1, 1]} : vector<8x16xf32> to vector<1x16xf32>
    %219 = vector.broadcast %217 : vector<8x1xf32> to vector<8x16xf32>
    %220 = vector.broadcast %218 : vector<1x16xf32> to vector<8x16xf32>
    %221 = arith.mulf %219, %220 : vector<8x16xf32>
    %222 = arith.addf %215, %221 : vector<8x16xf32>
    %223 = vector.extract_strided_slice %10 {offsets = [3, 0, 2], sizes = [1, 8, 1], strides = [1, 1, 1]} : vector<5x8x8xf32> to vector<1x8x1xf32>
    %224 = vector.shape_cast %223 : vector<1x8x1xf32> to vector<8x1xf32>
    %225 = vector.extract_strided_slice %208 {offsets = [2, 0], sizes = [1, 16], strides = [1, 1]} : vector<8x16xf32> to vector<1x16xf32>
    %226 = vector.broadcast %224 : vector<8x1xf32> to vector<8x16xf32>
    %227 = vector.broadcast %225 : vector<1x16xf32> to vector<8x16xf32>
    %228 = arith.mulf %226, %227 : vector<8x16xf32>
    %229 = arith.addf %222, %228 : vector<8x16xf32>
    %230 = vector.extract_strided_slice %10 {offsets = [3, 0, 3], sizes = [1, 8, 1], strides = [1, 1, 1]} : vector<5x8x8xf32> to vector<1x8x1xf32>
    %231 = vector.shape_cast %230 : vector<1x8x1xf32> to vector<8x1xf32>
    %232 = vector.extract_strided_slice %208 {offsets = [3, 0], sizes = [1, 16], strides = [1, 1]} : vector<8x16xf32> to vector<1x16xf32>
    %233 = vector.broadcast %231 : vector<8x1xf32> to vector<8x16xf32>
    %234 = vector.broadcast %232 : vector<1x16xf32> to vector<8x16xf32>
    %235 = arith.mulf %233, %234 : vector<8x16xf32>
    %236 = arith.addf %229, %235 : vector<8x16xf32>
    %237 = vector.extract_strided_slice %10 {offsets = [3, 0, 4], sizes = [1, 8, 1], strides = [1, 1, 1]} : vector<5x8x8xf32> to vector<1x8x1xf32>
    %238 = vector.shape_cast %237 : vector<1x8x1xf32> to vector<8x1xf32>
    %239 = vector.extract_strided_slice %208 {offsets = [4, 0], sizes = [1, 16], strides = [1, 1]} : vector<8x16xf32> to vector<1x16xf32>
    %240 = vector.broadcast %238 : vector<8x1xf32> to vector<8x16xf32>
    %241 = vector.broadcast %239 : vector<1x16xf32> to vector<8x16xf32>
    %242 = arith.mulf %240, %241 : vector<8x16xf32>
    %243 = arith.addf %236, %242 : vector<8x16xf32>
    %244 = vector.extract_strided_slice %10 {offsets = [3, 0, 5], sizes = [1, 8, 1], strides = [1, 1, 1]} : vector<5x8x8xf32> to vector<1x8x1xf32>
    %245 = vector.shape_cast %244 : vector<1x8x1xf32> to vector<8x1xf32>
    %246 = vector.extract_strided_slice %208 {offsets = [5, 0], sizes = [1, 16], strides = [1, 1]} : vector<8x16xf32> to vector<1x16xf32>
    %247 = vector.broadcast %245 : vector<8x1xf32> to vector<8x16xf32>
    %248 = vector.broadcast %246 : vector<1x16xf32> to vector<8x16xf32>
    %249 = arith.mulf %247, %248 : vector<8x16xf32>
    %250 = arith.addf %243, %249 : vector<8x16xf32>
    %251 = vector.extract_strided_slice %10 {offsets = [3, 0, 6], sizes = [1, 8, 1], strides = [1, 1, 1]} : vector<5x8x8xf32> to vector<1x8x1xf32>
    %252 = vector.shape_cast %251 : vector<1x8x1xf32> to vector<8x1xf32>
    %253 = vector.extract_strided_slice %208 {offsets = [6, 0], sizes = [1, 16], strides = [1, 1]} : vector<8x16xf32> to vector<1x16xf32>
    %254 = vector.broadcast %252 : vector<8x1xf32> to vector<8x16xf32>
    %255 = vector.broadcast %253 : vector<1x16xf32> to vector<8x16xf32>
    %256 = arith.mulf %254, %255 : vector<8x16xf32>
    %257 = arith.addf %250, %256 : vector<8x16xf32>
    %258 = vector.extract_strided_slice %10 {offsets = [3, 0, 7], sizes = [1, 8, 1], strides = [1, 1, 1]} : vector<5x8x8xf32> to vector<1x8x1xf32>
    %259 = vector.shape_cast %258 : vector<1x8x1xf32> to vector<8x1xf32>
    %260 = vector.extract_strided_slice %208 {offsets = [7, 0], sizes = [1, 16], strides = [1, 1]} : vector<8x16xf32> to vector<1x16xf32>
    %261 = vector.broadcast %259 : vector<8x1xf32> to vector<8x16xf32>
    %262 = vector.broadcast %260 : vector<1x16xf32> to vector<8x16xf32>
    %263 = arith.mulf %261, %262 : vector<8x16xf32>
    %264 = arith.addf %257, %263 : vector<8x16xf32>
    %c14_i32 = arith.constant 14 : i32
    %265 = tpu.dynamic_rotate %6 by %c14_i32 dim 1 : vector<8x16xf32>, i32 -> vector<8x16xf32>
    %266 = tpu.iota {dimensions = array<i32: 1>} : vector<8x16xi32>
    %267 = vector.extract_strided_slice %8 {offsets = [0, 2], sizes = [8, 1], strides = [1, 1]} : vector<8x4xf32> to vector<8x1xf32>
    %c14_i32_15 = arith.constant 14 : i32
    %268 = vector.broadcast %c14_i32_15 : i32 to vector<8x16xi32>
    %269 = arith.cmpi eq, %266, %268 : vector<8x16xi32>
    %270 = vector.shape_cast %267 : vector<8x1xf32> to vector<8x1xf32>
    %271 = vector.broadcast %270 : vector<8x1xf32> to vector<8x16xf32>
    %272 = arith.select %269, %271, %265 : vector<8x16xi1>, vector<8x16xf32>
    %273 = vector.extract_strided_slice %8 {offsets = [0, 3], sizes = [8, 1], strides = [1, 1]} : vector<8x4xf32> to vector<8x1xf32>
    %c15_i32_16 = arith.constant 15 : i32
    %274 = vector.broadcast %c15_i32_16 : i32 to vector<8x16xi32>
    %275 = arith.cmpi eq, %266, %274 : vector<8x16xi32>
    %276 = vector.shape_cast %273 : vector<8x1xf32> to vector<8x1xf32>
    %277 = vector.broadcast %276 : vector<8x1xf32> to vector<8x16xf32>
    %278 = arith.select %275, %277, %272 : vector<8x16xi1>, vector<8x16xf32>
    %279 = vector.extract_strided_slice %10 {offsets = [4, 0, 0], sizes = [1, 8, 1], strides = [1, 1, 1]} : vector<5x8x8xf32> to vector<1x8x1xf32>
    %280 = vector.shape_cast %279 : vector<1x8x1xf32> to vector<8x1xf32>
    %281 = vector.extract_strided_slice %278 {offsets = [0, 0], sizes = [1, 16], strides = [1, 1]} : vector<8x16xf32> to vector<1x16xf32>
    %282 = vector.broadcast %280 : vector<8x1xf32> to vector<8x16xf32>
    %283 = vector.broadcast %281 : vector<1x16xf32> to vector<8x16xf32>
    %284 = arith.mulf %282, %283 : vector<8x16xf32>
    %285 = arith.addf %264, %284 : vector<8x16xf32>
    %286 = vector.extract_strided_slice %10 {offsets = [4, 0, 1], sizes = [1, 8, 1], strides = [1, 1, 1]} : vector<5x8x8xf32> to vector<1x8x1xf32>
    %287 = vector.shape_cast %286 : vector<1x8x1xf32> to vector<8x1xf32>
    %288 = vector.extract_strided_slice %278 {offsets = [1, 0], sizes = [1, 16], strides = [1, 1]} : vector<8x16xf32> to vector<1x16xf32>
    %289 = vector.broadcast %287 : vector<8x1xf32> to vector<8x16xf32>
    %290 = vector.broadcast %288 : vector<1x16xf32> to vector<8x16xf32>
    %291 = arith.mulf %289, %290 : vector<8x16xf32>
    %292 = arith.addf %285, %291 : vector<8x16xf32>
    %293 = vector.extract_strided_slice %10 {offsets = [4, 0, 2], sizes = [1, 8, 1], strides = [1, 1, 1]} : vector<5x8x8xf32> to vector<1x8x1xf32>
    %294 = vector.shape_cast %293 : vector<1x8x1xf32> to vector<8x1xf32>
    %295 = vector.extract_strided_slice %278 {offsets = [2, 0], sizes = [1, 16], strides = [1, 1]} : vector<8x16xf32> to vector<1x16xf32>
    %296 = vector.broadcast %294 : vector<8x1xf32> to vector<8x16xf32>
    %297 = vector.broadcast %295 : vector<1x16xf32> to vector<8x16xf32>
    %298 = arith.mulf %296, %297 : vector<8x16xf32>
    %299 = arith.addf %292, %298 : vector<8x16xf32>
    %300 = vector.extract_strided_slice %10 {offsets = [4, 0, 3], sizes = [1, 8, 1], strides = [1, 1, 1]} : vector<5x8x8xf32> to vector<1x8x1xf32>
    %301 = vector.shape_cast %300 : vector<1x8x1xf32> to vector<8x1xf32>
    %302 = vector.extract_strided_slice %278 {offsets = [3, 0], sizes = [1, 16], strides = [1, 1]} : vector<8x16xf32> to vector<1x16xf32>
    %303 = vector.broadcast %301 : vector<8x1xf32> to vector<8x16xf32>
    %304 = vector.broadcast %302 : vector<1x16xf32> to vector<8x16xf32>
    %305 = arith.mulf %303, %304 : vector<8x16xf32>
    %306 = arith.addf %299, %305 : vector<8x16xf32>
    %307 = vector.extract_strided_slice %10 {offsets = [4, 0, 4], sizes = [1, 8, 1], strides = [1, 1, 1]} : vector<5x8x8xf32> to vector<1x8x1xf32>
    %308 = vector.shape_cast %307 : vector<1x8x1xf32> to vector<8x1xf32>
    %309 = vector.extract_strided_slice %278 {offsets = [4, 0], sizes = [1, 16], strides = [1, 1]} : vector<8x16xf32> to vector<1x16xf32>
    %310 = vector.broadcast %308 : vector<8x1xf32> to vector<8x16xf32>
    %311 = vector.broadcast %309 : vector<1x16xf32> to vector<8x16xf32>
    %312 = arith.mulf %310, %311 : vector<8x16xf32>
    %313 = arith.addf %306, %312 : vector<8x16xf32>
    %314 = vector.extract_strided_slice %10 {offsets = [4, 0, 5], sizes = [1, 8, 1], strides = [1, 1, 1]} : vector<5x8x8xf32> to vector<1x8x1xf32>
    %315 = vector.shape_cast %314 : vector<1x8x1xf32> to vector<8x1xf32>
    %316 = vector.extract_strided_slice %278 {offsets = [5, 0], sizes = [1, 16], strides = [1, 1]} : vector<8x16xf32> to vector<1x16xf32>
    %317 = vector.broadcast %315 : vector<8x1xf32> to vector<8x16xf32>
    %318 = vector.broadcast %316 : vector<1x16xf32> to vector<8x16xf32>
    %319 = arith.mulf %317, %318 : vector<8x16xf32>
    %320 = arith.addf %313, %319 : vector<8x16xf32>
    %321 = vector.extract_strided_slice %10 {offsets = [4, 0, 6], sizes = [1, 8, 1], strides = [1, 1, 1]} : vector<5x8x8xf32> to vector<1x8x1xf32>
    %322 = vector.shape_cast %321 : vector<1x8x1xf32> to vector<8x1xf32>
    %323 = vector.extract_strided_slice %278 {offsets = [6, 0], sizes = [1, 16], strides = [1, 1]} : vector<8x16xf32> to vector<1x16xf32>
    %324 = vector.broadcast %322 : vector<8x1xf32> to vector<8x16xf32>
    %325 = vector.broadcast %323 : vector<1x16xf32> to vector<8x16xf32>
    %326 = arith.mulf %324, %325 : vector<8x16xf32>
    %327 = arith.addf %320, %326 : vector<8x16xf32>
    %328 = vector.extract_strided_slice %10 {offsets = [4, 0, 7], sizes = [1, 8, 1], strides = [1, 1, 1]} : vector<5x8x8xf32> to vector<1x8x1xf32>
    %329 = vector.shape_cast %328 : vector<1x8x1xf32> to vector<8x1xf32>
    %330 = vector.extract_strided_slice %278 {offsets = [7, 0], sizes = [1, 16], strides = [1, 1]} : vector<8x16xf32> to vector<1x16xf32>
    %331 = vector.broadcast %329 : vector<8x1xf32> to vector<8x16xf32>
    %332 = vector.broadcast %330 : vector<1x16xf32> to vector<8x16xf32>
    %333 = arith.mulf %331, %332 : vector<8x16xf32>
    %334 = arith.addf %327, %333 : vector<8x16xf32>
    %cst_17 = arith.constant dense<0.000000e+00> : vector<8xf32>
    %335 = vector.multi_reduction <add>, %334, %cst_17 [1] : vector<8x16xf32> to vector<8xf32>
    %336 = vector.shape_cast %335 : vector<8xf32> to vector<8x1xf32>
    %337 = arith.mulf %334, %334 : vector<8x16xf32>
    %cst_18 = arith.constant dense<0.000000e+00> : vector<8xf32>
    %338 = vector.multi_reduction <add>, %337, %cst_18 [1] : vector<8x16xf32> to vector<8xf32>
    %339 = vector.shape_cast %338 : vector<8xf32> to vector<8x1xf32>
    %c0_19 = arith.constant 0 : index
    %c0_20 = arith.constant 0 : index
    %c0_21 = arith.constant 0 : index
    %340 = vector.load %arg6[%c0_19, %c0_20, %c0_21] : memref<1x8x2xf32, #tpu.memory_space<vmem>>, vector<1x8x2xf32>
    %341 = vector.shape_cast %340 : vector<1x8x2xf32> to vector<8x2xf32>
    %342 = tpu.concatenate %336, %339 in 1 : vector<8x1xf32>, vector<8x1xf32> -> vector<8x2xf32>
    %343 = arith.addf %341, %342 : vector<8x2xf32>
    %c0_22 = arith.constant 0 : index
    %c0_23 = arith.constant 0 : index
    %c0_24 = arith.constant 0 : index
    %344 = vector.load %arg6[%c0_22, %c0_23, %c0_24] : memref<1x8x2xf32, #tpu.memory_space<vmem>>, vector<1x8x2xf32>
    %345 = vector.shape_cast %344 : vector<1x8x2xf32> to vector<8x2xf32>
    %346 = vector.shape_cast %343 : vector<8x2xf32> to vector<1x8x2xf32>
    tpu.vector_store %arg6[%c0_22, %c0_23, %c0_24], %346 {strides = array<i32>} : memref<1x8x2xf32, #tpu.memory_space<vmem>>, vector<1x8x2xf32>,
    return
  }
  func.func @transform_0(%arg0: i32, %arg1: i32, %arg2: i32) -> (i32, i32, i32) {
    %c1_i32 = arith.constant 1 : i32
    %0 = arith.muli %arg0, %c1_i32 : i32
    %1 = arith.addi %0, %arg1 : i32
    %c0_i32 = arith.constant 0 : i32
    %c0_i32_0 = arith.constant 0 : i32
    return %1, %c0_i32, %arg2 : i32, i32, i32
  }
  func.func @transform_1(%arg0: i32, %arg1: i32, %arg2: i32) -> (i32, i32, i32, i32) {
    %c1_i32 = arith.constant 1 : i32
    %0 = arith.muli %arg0, %c1_i32 : i32
    %1 = arith.addi %0, %arg1 : i32
    %c0_i32 = arith.constant 0 : i32
    %c0_i32_0 = arith.constant 0 : i32
    %c0_i32_1 = arith.constant 0 : i32
    return %1, %arg2, %c0_i32, %c0_i32_0 : i32, i32, i32, i32
  }
  func.func @transform_2(%arg0: i32, %arg1: i32, %arg2: i32) -> (i32, i32, i32) {
    %c0_i32 = arith.constant 0 : i32
    %c0_i32_0 = arith.constant 0 : i32
    %c0_i32_1 = arith.constant 0 : i32
    %c0_i32_2 = arith.constant 0 : i32
    return %c0_i32, %c0_i32_0, %c0_i32_1 : i32, i32, i32
  }
  func.func @transform_3(%arg0: i32, %arg1: i32, %arg2: i32) -> (i32, i32, i32) {
    %c0_i32 = arith.constant 0 : i32
    %c0_i32_0 = arith.constant 0 : i32
    %c0_i32_1 = arith.constant 0 : i32
    return %arg0, %c0_i32, %c0_i32_0 : i32, i32, i32
  }
}

</mosaic_0001>

<llo_original>
// kernel: tpu_custom_call.1
$region0: #{tpu_custom_call.1}
  #allocation0 [shape = 'u32[]', space=smem, size = 0x4, offset = 0x4, fixed_abs, tag = 'smem constant byte address 0x4 - core index']
  #allocation1 [shape = 'u32[144,128]{1,0:T(1,128)}', space=vmem, size = 0x12000, scoped, tag = 'internal scratch']
  %s0 = inlined_call_operand.hbm [shape: f32[2,8,16], index: 0, kind: input, shape index: {}]
  %s1 = inlined_call_operand.hbm [shape: f32[2,1,8,4], index: 1, kind: input, shape index: {}]
  %s2 = inlined_call_operand.hbm [shape: f32[5,8,8], index: 2, kind: input, shape index: {}]
  %s3 = inlined_call_operand.hbm [shape: f32[2,8,2], index: 3, kind: output, shape index: {}]
  %s4 = sld [smem:[#allocation0]]
  $region61: #{tpu_custom_call.1} parent=0
    _
  %s6 = ssub.s32 1, %s4
  %s7 = scalar_select 0, %s6, %s4
  $region1: #{tpu_custom_call.1} parent=0
    #allocation2 [shape = 'u8[8192]{0}', space=vmem, size = 0x2000, scoped, tag = 'input window, operand 0']
    #allocation3 [shape = 's32[2]{0}', space=sflag, size = 0x8, scoped, tag = 'scoped memory for tpu_custom_call.1']
    #allocation4 [shape = 's32[2]{0}', space=sflag, size = 0x8, scoped, tag = 'scoped memory for tpu_custom_call.1']
    #allocation5 [shape = 'u8[8192]{0}', space=vmem, size = 0x2000, scoped, tag = 'input window, operand 1']
    #allocation6 [shape = 's32[2]{0}', space=sflag, size = 0x8, scoped, tag = 'scoped memory for tpu_custom_call.1']
    #allocation7 [shape = 'u8[20480]{0}', space=vmem, size = 0x5000, scoped, tag = 'input window, operand 2, single buffered']
    #allocation8 [shape = 'u8[8192]{0}', space=vmem, size = 0x2000, scoped, tag = 'output window, operand 0']
    %8 = vsyncpa [#allocation3], 0
    %s9 = scalar_lea.sflag [#allocation3], 1
    %10 = vsyncpa %s9, 0
    %11 = vsyncpa [#allocation6], 0
    %s12 = scalar_lea.sflag [#allocation6], 1
    %13 = vsyncpa %s12, 0
    %14 = vsyncpa [#allocation4], 0
    %s15 = scalar_lea.sflag [#allocation4], 1
    %16 = vsyncpa %s15, 0
    loop: start=0, step=1, limit=4
    $region2: #{tpu_custom_call.1} parent=1 // loop_pre_header
      _
    $region3: #{tpu_custom_call.1} parent=1 // loop_header
      %s18 = sphi 0, %s22
      %p19 = scmp.ge.s32.totalorder %s18, 4
      %s25 = sphi 0, %s44
      %s26 = sphi 0, %s40
      %s27 = sphi 0, %s36
      %s28 = sphi 0, %s25
      %s29 = sphi 0, %s26
      %s30 = sphi 0, %s27
      %s31 = sphi 0, %s28
      %s32 = sphi 0, %s29
      %s33 = sphi 0, %s30
      %s51 = sphi 0, %s53
      %s54 = sphi 0, %s51
      %s55 = sphi 0, %s54
      %s71 = sphi 0, %s55
      %s81 = sphi 0, %s83
      %s84 = sphi 0, %s81
      %s85 = sphi 0, %s84
      %s101 = sphi 0, %s85
      %s105 = sphi 0, %s105
      %s107 = sphi 0, %s105
      %s108 = sphi 0, %s107
      %s122 = sphi 0, %s108
      %s128 = sphi 0, %s130
      %s131 = sphi 0, %s128
      %s132 = sphi 0, %s131
      %s148 = sphi 0, %s132
    $region4: #{tpu_custom_call.1} parent=1 // loop_header_branch
      %21 = sbr.rel (%p19) target = $region8
    $region5: #{tpu_custom_call.1} parent=1 // loop_body
      %s23 = ssub.s32 %s18, 1
      %s24 = ssub.s32 %s18, 2
      %s34 = sadd.s32 1, %s27
      %p35 = scmp.ge.s32.totalorder %s34, 1
      %s36 = scalar_select %p35, 0, %s34
      %s37 = sadd.s32 1, %s26
      %s38 = scalar_select %p35, %s37, %s26
      %p39 = scmp.ge.s32.totalorder %s38, 1
      %s40 = scalar_select %p39, 0, %s38
      %s41 = sadd.s32 1, %s25
      %s42 = scalar_select %p39, %s41, %s25
      %p43 = scmp.ge.s32.totalorder %s42, 2
      %s44 = scalar_select %p43, 0, %s42
      %s45 = sadd.s32 %s25, %s26
      %s46 = sadd.s32 %s44, %s40
      %s47 = ssub.s32 %s45, %s46
      %s48 = ssub.s32 %s27, %s36
      %s49 = sor.u32 %s47, %s48
      %p50 = scmp.eq.s32.totalorder %s49, 0
      %s52 = sadd.s32 %s51, 1
      %s53 = scalar_select %p50, %s51, %s52
      %p56 = pneg %p50
      %p57 = scmp.eq.s32.totalorder %s18, 1
      %p58 = por %p56, %p57
      %p59 = scmp.ne.s32.totalorder %s51, %s54
      %p60 = scmp.eq.s32.totalorder %s18, 0
      %p61 = por %p59, %p60
      %p62 = scmp.ne.s32.totalorder %s51, %s54
      %p63 = scmp.eq.s32.totalorder %s23, 1
      %p64 = por %p62, %p63
      %p65 = scmp.ne.s32.totalorder %s54, %s55
      %p66 = scmp.eq.s32.totalorder %s23, 0
      %p67 = por %p65, %p66
      %p68 = scmp.ne.s32.totalorder %s54, %s55
      %p69 = scmp.eq.s32.totalorder %s24, 1
      %p70 = por %p68, %p69
      %p72 = scmp.ne.s32.totalorder %s55, %s71
      %p73 = scmp.eq.s32.totalorder %s24, 0
      %p74 = por %p72, %p73
      %s75 = sadd.s32 %s25, %s26
      %s76 = sadd.s32 %s44, %s40
      %s77 = ssub.s32 %s75, %s76
      %s78 = ssub.s32 %s27, %s36
      %s79 = sor.u32 %s77, %s78
      %p80 = scmp.eq.s32.totalorder %s79, 0
      %s82 = sadd.s32 %s81, 1
      %s83 = scalar_select %p80, %s81, %s82
      %p86 = pneg %p80
      %p87 = scmp.eq.s32.totalorder %s18, 1
      %p88 = por %p86, %p87
      %p89 = scmp.ne.s32.totalorder %s81, %s84
      %p90 = scmp.eq.s32.totalorder %s18, 0
      %p91 = por %p89, %p90
      %p92 = scmp.ne.s32.totalorder %s81, %s84
      %p93 = scmp.eq.s32.totalorder %s23, 1
      %p94 = por %p92, %p93
      %p95 = scmp.ne.s32.totalorder %s84, %s85
      %p96 = scmp.eq.s32.totalorder %s23, 0
      %p97 = por %p95, %p96
      %p98 = scmp.ne.s32.totalorder %s84, %s85
      %p99 = scmp.eq.s32.totalorder %s24, 1
      %p100 = por %p98, %p99
      %p102 = scmp.ne.s32.totalorder %s85, %s101
      %p103 = scmp.eq.s32.totalorder %s24, 0
      %p104 = por %p102, %p103
      %s106 = sadd.s32 %s105, 1
      %p109 = scmp.eq.s32.totalorder %s18, 1
      %p110 = scmp.ne.s32.totalorder %s105, %s107
      %p111 = scmp.eq.s32.totalorder %s18, 0
      %p112 = por %p110, %p111
      %p113 = scmp.ne.s32.totalorder %s105, %s107
      %p114 = scmp.eq.s32.totalorder %s23, 1
      %p115 = por %p113, %p114
      %p116 = scmp.ne.s32.totalorder %s107, %s108
      %p117 = scmp.eq.s32.totalorder %s23, 0
      %p118 = por %p116, %p117
      %p119 = scmp.ne.s32.totalorder %s107, %s108
      %p120 = scmp.eq.s32.totalorder %s24, 1
      %p121 = por %p119, %p120
      %p123 = scmp.ne.s32.totalorder %s108, %s122
      %p124 = scmp.eq.s32.totalorder %s24, 0
      %p125 = por %p123, %p124
      %s126 = ssub.s32 %s25, %s44
      %p127 = scmp.eq.s32.totalorder %s126, 0
      %s129 = sadd.s32 %s128, 1
      %s130 = scalar_select %p127, %s128, %s129
      %p133 = pneg %p127
      %p134 = scmp.eq.s32.totalorder %s18, 1
      %p135 = por %p133, %p134
      %p136 = scmp.ne.s32.totalorder %s128, %s131
      %p137 = scmp.eq.s32.totalorder %s18, 0
      %p138 = por %p136, %p137
      %p139 = scmp.ne.s32.totalorder %s128, %s131
      %p140 = scmp.eq.s32.totalorder %s23, 1
      %p141 = por %p139, %p140
      %p142 = scmp.ne.s32.totalorder %s131, %s132
      %p143 = scmp.eq.s32.totalorder %s23, 0
      %p144 = por %p142, %p143
      %p145 = scmp.ne.s32.totalorder %s131, %s132
      %p146 = scmp.eq.s32.totalorder %s24, 1
      %p147 = por %p145, %p146
      %p149 = scmp.ne.s32.totalorder %s132, %s148
      %p150 = scmp.eq.s32.totalorder %s24, 0
      %p151 = por %p149, %p150
      %p152 = scmp.le.s32.totalorder 1, %s18
      %p153 = scmp.lt.s32.totalorder %s18, 3
      %p154 = pnand %p152, %p153
      %p155 = pneg %p154
      // Predicated region
      $region9: #{tpu_custom_call.1} parent=5 // pred_check
        _
      $region10: #{tpu_custom_call.1} parent=5 // pred_check_branch
        %157 = sbr.rel (%p154) target = $region12
      $region11: #{tpu_custom_call.1} parent=5 // pred_region
        %s158 = ssub.s32 %s18, 1
        // Predicated region
        $region13: #{tpu_custom_call.1} parent=11 // pred_check
          %p159 = pneg %p118
        $region14: #{tpu_custom_call.1} parent=11 // pred_check_branch
          %161 = sbr.rel (%p159) target = $region16
        $region15: #{tpu_custom_call.1} parent=11 // pred_region
          %s163 = ssub.s32 640, 640
          %164 = vsyncadd [#allocation6], %s163
          %s165 = sshll.u32 [#allocation7], 4
          %s166 = int_to_ptr.vmem [resolvable:$true] %s165
          %171 = dma.hbm_to_vmem [thread:$0]  %s2, 640, %s166, [#allocation6], 128, 128, 8
        $region16: #{tpu_custom_call.1} parent=11 // pred_fallthru
          _
      $region12: #{tpu_custom_call.1} parent=5 // pred_fallthru
        _
      %p172 = scmp.lt.s32.totalorder %s18, 2
      // Predicated region
      $region17: #{tpu_custom_call.1} parent=5 // pred_check
        %p173 = pneg %p172
      $region18: #{tpu_custom_call.1} parent=5 // pred_check_branch
        %175 = sbr.rel (%p173) target = $region20
      $region19: #{tpu_custom_call.1} parent=5 // pred_region
        // Predicated region
        $region21: #{tpu_custom_call.1} parent=19 // pred_check
          %p176 = pneg %p61
        $region22: #{tpu_custom_call.1} parent=19 // pred_check_branch
          %178 = sbr.rel (%p176) target = $region24
        $region23: #{tpu_custom_call.1} parent=19 // pred_region
          %s179 = sand.u32 %s51, 1
          %s180 = scalar_lea.sflag [#allocation3], %s179
          %s181 = sand.u32 %s51, 1
          %s182 = smul.addr %s181, 8
          %s183 = scalar_lea.vmem [#allocation2], %s182
          %s184 = sadd.s32 %s25, %s26
          %s186 = ssub.s32 128, 128
          %187 = vsyncadd %s180, %s186
          %s188 = sadd.s32 %s27, %s184
          %s189 = smul.addr %s188, 128
          %s190 = scalar_lea.hbm %s0, %s189
          %s192 = sshll.u32 %s183, 4
          %s193 = int_to_ptr.vmem [resolvable:$true] %s192
          %195 = dma.hbm_to_vmem [thread:$0]  %s190, 128, %s193, %s180
        $region24: #{tpu_custom_call.1} parent=19 // pred_fallthru
          _
        // Predicated region
        $region25: #{tpu_custom_call.1} parent=19 // pred_check
          %p196 = pneg %p91
        $region26: #{tpu_custom_call.1} parent=19 // pred_check_branch
          %198 = sbr.rel (%p196) target = $region28
        $region27: #{tpu_custom_call.1} parent=19 // pred_region
          %s199 = sand.u32 %s18, 1
          %s200 = scalar_lea.sflag [#allocation6], %s199
          %s201 = sand.u32 %s81, 1
          %s202 = smul.addr %s201, 8
          %s203 = scalar_lea.vmem [#allocation5], %s202
          %s204 = sadd.s32 %s25, %s26
          %s206 = ssub.s32 128, 128
          %207 = vsyncadd %s200, %s206
          %s208 = sadd.s32 %s27, %s204
          %s209 = smul.addr %s208, 128
          %s210 = scalar_lea.hbm %s1, %s209
          %s212 = sshll.u32 %s203, 4
          %s213 = int_to_ptr.vmem [resolvable:$true] %s212
          %215 = dma.hbm_to_vmem [thread:$0]  %s210, 128, %s213, %s200
        $region28: #{tpu_custom_call.1} parent=19 // pred_fallthru
          _
      $region20: #{tpu_custom_call.1} parent=5 // pred_fallthru
        _
      %p216 = scmp.le.s32.totalorder 1, %s18
      %p217 = scmp.lt.s32.totalorder %s18, 3
      %p218 = pnand %p216, %p217
      %p219 = pneg %p218
      // Predicated region
      $region29: #{tpu_custom_call.1} parent=5 // pred_check
        _
      $region30: #{tpu_custom_call.1} parent=5 // pred_check_branch
        %221 = sbr.rel (%p218) target = $region32
      $region31: #{tpu_custom_call.1} parent=5 // pred_region
        %s222 = ssub.s32 %s18, 1
        %s223 = sand.u32 %s54, 1
        %s224 = scalar_lea.sflag [#allocation3], %s223
        %s225 = sand.u32 %s54, 1
        %s226 = smul.addr %s225, 8
        %s227 = scalar_lea.vmem [#allocation2], %s226
        // Predicated region
        $region33: #{tpu_custom_call.1} parent=31 // pred_check
          %p228 = pneg %p67
        $region34: #{tpu_custom_call.1} parent=31 // pred_check_branch
          %230 = sbr.rel (%p228) target = $region36
        $region35: #{tpu_custom_call.1} parent=31 // pred_region
          %231 = dma.done %s224, 128
        $region36: #{tpu_custom_call.1} parent=31 // pred_fallthru
          _
        %s232 = sand.u32 %s23, 1
        %s233 = scalar_lea.sflag [#allocation6], %s232
        %s234 = sand.u32 %s84, 1
        %s235 = smul.addr %s234, 8
        %s236 = scalar_lea.vmem [#allocation5], %s235
        // Predicated region
        $region37: #{tpu_custom_call.1} parent=31 // pred_check
          %p237 = pneg %p97
        $region38: #{tpu_custom_call.1} parent=31 // pred_check_branch
          %239 = sbr.rel (%p237) target = $region40
        $region39: #{tpu_custom_call.1} parent=31 // pred_region
          %240 = dma.done %s233, 128
        $region40: #{tpu_custom_call.1} parent=31 // pred_fallthru
          _
        // Predicated region
        $region41: #{tpu_custom_call.1} parent=31 // pred_check
          %p241 = pneg %p118
        $region42: #{tpu_custom_call.1} parent=31 // pred_check_branch
          %243 = sbr.rel (%p241) target = $region44
        $region43: #{tpu_custom_call.1} parent=31 // pred_region
          %244 = dma.done [#allocation6], 640
        $region44: #{tpu_custom_call.1} parent=31 // pred_fallthru
          _
        %s245 = sand.u32 %s54, 1
        %s246 = scalar_lea.sflag [#allocation3], %s245
        %s247 = sand.u32 %s54, 1
        %s248 = smul.addr %s247, 8
        %s249 = scalar_lea.vmem [#allocation2], %s248
        %p250 = pneg %p67
        %p251 = pneg %p64
        %s252 = sand.u32 %s23, 1
        %s253 = scalar_lea.sflag [#allocation6], %s252
        %s254 = sand.u32 %s84, 1
        %s255 = smul.addr %s254, 8
        %s256 = scalar_lea.vmem [#allocation5], %s255
        %p257 = pneg %p97
        %p258 = pneg %p94
        %p259 = pneg %p118
        %p260 = pneg %p115
        %p261 = pneg %p144
        %p262 = pneg %p141
        %s263 = sand.u32 %s131, 1
        %s264 = scalar_lea.sflag [#allocation4], %s263
        %s265 = sand.u32 %s131, 1
        %s266 = smul.addr %s265, 8
        %s267 = scalar_lea.vmem [#allocation8], %s266
        %s268 = sadd.s32 %s28, %s29
        %s269 = sadd.s32 %s28, %s29
        %p270 = scmp.eq.s32.totalorder %s29, 0
        %p271 = scmp.eq.s32.totalorder %s30, 0
        %p272 = pnand %p270, %p271
        %p273 = pneg %p272
        // Predicated region
        $region45: #{tpu_custom_call.1} parent=31 // pred_check
          _
        $region46: #{tpu_custom_call.1} parent=31 // pred_check_branch
          %275 = sbr.rel (%p272) target = $region48
        $region47: #{tpu_custom_call.1} parent=31 // pred_region
          %vm276 = vcmask 15360
          %277 = vst.msk [vmem:[%s267] sm:$0xff] %vm276, 0.0
        $region48: #{tpu_custom_call.1} parent=31 // pred_fallthru
          _
        %v278 = vld [vmem:[%s227] sm:$0xff]
        %v279 = vld [vmem:[%s236] sm:$0xff]
        %v280 = vld [vmem:[#allocation7] sm:$0xff]
        %v281 = vld [vmem:[#allocation7 + $0x8] sm:$0xff]
        %v282 = vld [vmem:[#allocation7 + $0x10] sm:$0xff]
        %v283 = vld [vmem:[#allocation7 + $0x18] sm:$0xff]
        %v284 = vld [vmem:[#allocation7 + $0x20] sm:$0xff]
        %vm285 = vcmask 1047680
        %286 = vrot.lane.b32.xlu0 %v278, 16
        %v287 = vpop.permute.xlu0 %286
        %v288 = vsel %vm285, %v287, %v278
        %289 = vrot.lane.b32.xlu0 %v288, 16
        %v290 = vpop.permute.xlu0 %289
        %v291 = vsel %vm285, %v290, %v278
        %v292 = vlaneseq
        %v293 = vand.u32 %v292, 127
        %vm294 = vcmp.eq.s32.totalorder %v293, 0
        %296 = vset.pattern.permute.xlu0 0
        %297 = vperm.xlu0 %296, %v279
        %v298 = vpop.permute.xlu0 %297
        %301 = vrot.lane.b32.xlu0 %v291, 114
        %v302 = vpop.permute.xlu0 %301
        %v304 = vsel %vm294, %v298, %v302
        %vm305 = vcmp.eq.s32.totalorder %v293, 1
        %306 = vset.pattern.permute.xlu0 1
        %307 = vperm.xlu0 %306, %v279
        %v308 = vpop.permute.xlu0 %307
        %v310 = vsel %vm305, %v308, %v304
        %312 = vset.pattern.permute.xlu0 0
        %313 = vperm.xlu0 %312, %v280
        %v314 = vpop.permute.xlu0 %313
        %v316 = vlaneseq
        %v317 = vshrl.u32 %v316, 7
        %v318 = vsub.s32 0, %v317
        %v319 = vrot.slane %v310, %v318
        %v320 = vmul.f32 %v314, %v319
        %v321 = vadd.f32 %v320, 0.0
        %322 = vset.pattern.permute.xlu0 1
        %323 = vperm.xlu0 %322, %v280
        %v324 = vpop.permute.xlu0 %323
        %v326 = vlaneseq
        %v327 = vshrl.u32 %v326, 7
        %v328 = vsub.s32 1, %v327
        %v329 = vrot.slane %v310, %v328
        %v330 = vmul.f32 %v324, %v329
        %v331 = vadd.f32 %v321, %v330
        %332 = vset.pattern.permute.xlu0 2
        %333 = vperm.xlu0 %332, %v280
        %v334 = vpop.permute.xlu0 %333
        %v336 = vlaneseq
        %v337 = vshrl.u32 %v336, 7
        %v338 = vsub.s32 2, %v337
        %v339 = vrot.slane %v310, %v338
        %v340 = vmul.f32 %v334, %v339
        %v341 = vadd.f32 %v331, %v340
        %342 = vset.pattern.permute.xlu0 3
        %343 = vperm.xlu0 %342, %v280
        %v344 = vpop.permute.xlu0 %343
        %v346 = vlaneseq
        %v347 = vshrl.u32 %v346, 7
        %v348 = vsub.s32 3, %v347
        %v349 = vrot.slane %v310, %v348
        %v350 = vmul.f32 %v344, %v349
        %v351 = vadd.f32 %v341, %v350
        %352 = vset.pattern.permute.xlu0 4
        %353 = vperm.xlu0 %352, %v280
        %v354 = vpop.permute.xlu0 %353
        %v356 = vlaneseq
        %v357 = vshrl.u32 %v356, 7
        %v358 = vsub.s32 4, %v357
        %v359 = vrot.slane %v310, %v358
        %v360 = vmul.f32 %v354, %v359
        %v361 = vadd.f32 %v351, %v360
        %362 = vset.pattern.permute.xlu0 5
        %363 = vperm.xlu0 %362, %v280
        %v364 = vpop.permute.xlu0 %363
        %v366 = vlaneseq
        %v367 = vshrl.u32 %v366, 7
        %v368 = vsub.s32 5, %v367
        %v369 = vrot.slane %v310, %v368
        %v370 = vmul.f32 %v364, %v369
        %v371 = vadd.f32 %v361, %v370
        %372 = vset.pattern.permute.xlu0 6
        %373 = vperm.xlu0 %372, %v280
        %v374 = vpop.permute.xlu0 %373
        %v376 = vlaneseq
        %v377 = vshrl.u32 %v376, 7
        %v378 = vsub.s32 6, %v377
        %v379 = vrot.slane %v310, %v378
        %v380 = vmul.f32 %v374, %v379
        %v381 = vadd.f32 %v371, %v380
        %382 = vset.pattern.permute.xlu0 7
        %383 = vperm.xlu0 %382, %v280
        %v384 = vpop.permute.xlu0 %383
        %v386 = vlaneseq
        %v387 = vshrl.u32 %v386, 7
        %v388 = vsub.s32 7, %v387
        %v389 = vrot.slane %v310, %v388
        %v390 = vmul.f32 %v384, %v389
        %v391 = vadd.f32 %v381, %v390
        %392 = vrot.lane.b32.xlu0 %v291, 113
        %v393 = vpop.permute.xlu0 %392
        %v395 = vsel %vm294, %v308, %v393
        %397 = vset.pattern.permute.xlu0 0
        %398 = vperm.xlu0 %397, %v281
        %v399 = vpop.permute.xlu0 %398
        %v401 = vlaneseq
        %v402 = vshrl.u32 %v401, 7
        %v403 = vsub.s32 0, %v402
        %v404 = vrot.slane %v395, %v403
        %v405 = vmul.f32 %v399, %v404
        %v406 = vadd.f32 %v391, %v405
        %407 = vset.pattern.permute.xlu0 1
        %408 = vperm.xlu0 %407, %v281
        %v409 = vpop.permute.xlu0 %408
        %v411 = vlaneseq
        %v412 = vshrl.u32 %v411, 7
        %v413 = vsub.s32 1, %v412
        %v414 = vrot.slane %v395, %v413
        %v415 = vmul.f32 %v409, %v414
        %v416 = vadd.f32 %v406, %v415
        %417 = vset.pattern.permute.xlu0 2
        %418 = vperm.xlu0 %417, %v281
        %v419 = vpop.permute.xlu0 %418
        %v421 = vlaneseq
        %v422 = vshrl.u32 %v421, 7
        %v423 = vsub.s32 2, %v422
        %v424 = vrot.slane %v395, %v423
        %v425 = vmul.f32 %v419, %v424
        %v426 = vadd.f32 %v416, %v425
        %427 = vset.pattern.permute.xlu0 3
        %428 = vperm.xlu0 %427, %v281
        %v429 = vpop.permute.xlu0 %428
        %v431 = vlaneseq
        %v432 = vshrl.u32 %v431, 7
        %v433 = vsub.s32 3, %v432
        %v434 = vrot.slane %v395, %v433
        %v435 = vmul.f32 %v429, %v434
        %v436 = vadd.f32 %v426, %v435
        %437 = vset.pattern.permute.xlu0 4
        %438 = vperm.xlu0 %437, %v281
        %v439 = vpop.permute.xlu0 %438
        %v441 = vlaneseq
        %v442 = vshrl.u32 %v441, 7
        %v443 = vsub.s32 4, %v442
        %v444 = vrot.slane %v395, %v443
        %v445 = vmul.f32 %v439, %v444
        %v446 = vadd.f32 %v436, %v445
        %447 = vset.pattern.permute.xlu0 5
        %448 = vperm.xlu0 %447, %v281
        %v449 = vpop.permute.xlu0 %448
        %v451 = vlaneseq
        %v452 = vshrl.u32 %v451, 7
        %v453 = vsub.s32 5, %v452
        %v454 = vrot.slane %v395, %v453
        %v455 = vmul.f32 %v449, %v454
        %v456 = vadd.f32 %v446, %v455
        %457 = vset.pattern.permute.xlu0 6
        %458 = vperm.xlu0 %457, %v281
        %v459 = vpop.permute.xlu0 %458
        %v461 = vlaneseq
        %v462 = vshrl.u32 %v461, 7
        %v463 = vsub.s32 6, %v462
        %v464 = vrot.slane %v395, %v463
        %v465 = vmul.f32 %v459, %v464
        %v466 = vadd.f32 %v456, %v465
        %467 = vset.pattern.permute.xlu0 7
        %468 = vperm.xlu0 %467, %v281
        %v469 = vpop.permute.xlu0 %468
        %v471 = vlaneseq
        %v472 = vshrl.u32 %v471, 7
        %v473 = vsub.s32 7, %v472
        %v474 = vrot.slane %v395, %v473
        %v475 = vmul.f32 %v469, %v474
        %v476 = vadd.f32 %v466, %v475
        %478 = vset.pattern.permute.xlu0 0
        %479 = vperm.xlu0 %478, %v282
        %v480 = vpop.permute.xlu0 %479
        %v482 = vlaneseq
        %v483 = vshrl.u32 %v482, 7
        %v484 = vsub.s32 0, %v483
        %v485 = vrot.slane %v278, %v484
        %v486 = vmul.f32 %v480, %v485
        %v487 = vadd.f32 %v476, %v486
        %488 = vset.pattern.permute.xlu0 1
        %489 = vperm.xlu0 %488, %v282
        %v490 = vpop.permute.xlu0 %489
        %v492 = vlaneseq
        %v493 = vshrl.u32 %v492, 7
        %v494 = vsub.s32 1, %v493
        %v495 = vrot.slane %v278, %v494
        %v496 = vmul.f32 %v490, %v495
        %v497 = vadd.f32 %v487, %v496
        %498 = vset.pattern.permute.xlu0 2
        %499 = vperm.xlu0 %498, %v282
        %v500 = vpop.permute.xlu0 %499
        %v502 = vlaneseq
        %v503 = vshrl.u32 %v502, 7
        %v504 = vsub.s32 2, %v503
        %v505 = vrot.slane %v278, %v504
        %v506 = vmul.f32 %v500, %v505
        %v507 = vadd.f32 %v497, %v506
        %508 = vset.pattern.permute.xlu0 3
        %509 = vperm.xlu0 %508, %v282
        %v510 = vpop.permute.xlu0 %509
        %v512 = vlaneseq
        %v513 = vshrl.u32 %v512, 7
        %v514 = vsub.s32 3, %v513
        %v515 = vrot.slane %v278, %v514
        %v516 = vmul.f32 %v510, %v515
        %v517 = vadd.f32 %v507, %v516
        %518 = vset.pattern.permute.xlu0 4
        %519 = vperm.xlu0 %518, %v282
        %v520 = vpop.permute.xlu0 %519
        %v522 = vlaneseq
        %v523 = vshrl.u32 %v522, 7
        %v524 = vsub.s32 4, %v523
        %v525 = vrot.slane %v278, %v524
        %v526 = vmul.f32 %v520, %v525
        %v527 = vadd.f32 %v517, %v526
        %528 = vset.pattern.permute.xlu0 5
        %529 = vperm.xlu0 %528, %v282
        %v530 = vpop.permute.xlu0 %529
        %v532 = vlaneseq
        %v533 = vshrl.u32 %v532, 7
        %v534 = vsub.s32 5, %v533
        %v535 = vrot.slane %v278, %v534
        %v536 = vmul.f32 %v530, %v535
        %v537 = vadd.f32 %v527, %v536
        %538 = vset.pattern.permute.xlu0 6
        %539 = vperm.xlu0 %538, %v282
        %v540 = vpop.permute.xlu0 %539
        %v542 = vlaneseq
        %v543 = vshrl.u32 %v542, 7
        %v544 = vsub.s32 6, %v543
        %v545 = vrot.slane %v278, %v544
        %v546 = vmul.f32 %v540, %v545
        %v547 = vadd.f32 %v537, %v546
        %548 = vset.pattern.permute.xlu0 7
        %549 = vperm.xlu0 %548, %v282
        %v550 = vpop.permute.xlu0 %549
        %v552 = vlaneseq
        %v553 = vshrl.u32 %v552, 7
        %v554 = vsub.s32 7, %v553
        %v555 = vrot.slane %v278, %v554
        %v556 = vmul.f32 %v550, %v555
        %v557 = vadd.f32 %v547, %v556
        %vm558 = vcmp.eq.s32.totalorder %v293, 15
        %559 = vset.pattern.permute.xlu0 2
        %560 = vperm.xlu0 %559, %v279
        %v561 = vpop.permute.xlu0 %560
        %563 = vrot.lane.b32.xlu0 %v291, 127
        %v564 = vpop.permute.xlu0 %563
        %v566 = vsel %vm558, %v561, %v564
        %568 = vset.pattern.permute.xlu0 0
        %569 = vperm.xlu0 %568, %v283
        %v570 = vpop.permute.xlu0 %569
        %v572 = vlaneseq
        %v573 = vshrl.u32 %v572, 7
        %v574 = vsub.s32 0, %v573
        %v575 = vrot.slane %v566, %v574
        %v576 = vmul.f32 %v570, %v575
        %v577 = vadd.f32 %v557, %v576
        %578 = vset.pattern.permute.xlu0 1
        %579 = vperm.xlu0 %578, %v283
        %v580 = vpop.permute.xlu0 %579
        %v582 = vlaneseq
        %v583 = vshrl.u32 %v582, 7
        %v584 = vsub.s32 1, %v583
        %v585 = vrot.slane %v566, %v584
        %v586 = vmul.f32 %v580, %v585
        %v587 = vadd.f32 %v577, %v586
        %588 = vset.pattern.permute.xlu0 2
        %589 = vperm.xlu0 %588, %v283
        %v590 = vpop.permute.xlu0 %589
        %v592 = vlaneseq
        %v593 = vshrl.u32 %v592, 7
        %v594 = vsub.s32 2, %v593
        %v595 = vrot.slane %v566, %v594
        %v596 = vmul.f32 %v590, %v595
        %v597 = vadd.f32 %v587, %v596
        %598 = vset.pattern.permute.xlu0 3
        %599 = vperm.xlu0 %598, %v283
        %v600 = vpop.permute.xlu0 %599
        %v602 = vlaneseq
        %v603 = vshrl.u32 %v602, 7
        %v604 = vsub.s32 3, %v603
        %v605 = vrot.slane %v566, %v604
        %v606 = vmul.f32 %v600, %v605
        %v607 = vadd.f32 %v597, %v606
        %608 = vset.pattern.permute.xlu0 4
        %609 = vperm.xlu0 %608, %v283
        %v610 = vpop.permute.xlu0 %609
        %v612 = vlaneseq
        %v613 = vshrl.u32 %v612, 7
        %v614 = vsub.s32 4, %v613
        %v615 = vrot.slane %v566, %v614
        %v616 = vmul.f32 %v610, %v615
        %v617 = vadd.f32 %v607, %v616
        %618 = vset.pattern.permute.xlu0 5
        %619 = vperm.xlu0 %618, %v283
        %v620 = vpop.permute.xlu0 %619
        %v622 = vlaneseq
        %v623 = vshrl.u32 %v622, 7
        %v624 = vsub.s32 5, %v623
        %v625 = vrot.slane %v566, %v624
        %v626 = vmul.f32 %v620, %v625
        %v627 = vadd.f32 %v617, %v626
        %628 = vset.pattern.permute.xlu0 6
        %629 = vperm.xlu0 %628, %v283
        %v630 = vpop.permute.xlu0 %629
        %v632 = vlaneseq
        %v633 = vshrl.u32 %v632, 7
        %v634 = vsub.s32 6, %v633
        %v635 = vrot.slane %v566, %v634
        %v636 = vmul.f32 %v630, %v635
        %v637 = vadd.f32 %v627, %v636
        %638 = vset.pattern.permute.xlu0 7
        %639 = vperm.xlu0 %638, %v283
        %v640 = vpop.permute.xlu0 %639
        %v642 = vlaneseq
        %v643 = vshrl.u32 %v642, 7
        %v644 = vsub.s32 7, %v643
        %v645 = vrot.slane %v566, %v644
        %v646 = vmul.f32 %v640, %v645
        %v647 = vadd.f32 %v637, %v646
        %vm648 = vcmp.eq.s32.totalorder %v293, 14
        %649 = vrot.lane.b32.xlu0 %v291, 126
        %v650 = vpop.permute.xlu0 %649
        %v652 = vsel %vm648, %v561, %v650
        %653 = vset.pattern.permute.xlu0 3
        %654 = vperm.xlu0 %653, %v279
        %v655 = vpop.permute.xlu0 %654
        %v657 = vsel %vm558, %v655, %v652
        %659 = vset.pattern.permute.xlu0 0
        %660 = vperm.xlu0 %659, %v284
        %v661 = vpop.permute.xlu0 %660
        %v663 = vlaneseq
        %v664 = vshrl.u32 %v663, 7
        %v665 = vsub.s32 0, %v664
        %v666 = vrot.slane %v657, %v665
        %v667 = vmul.f32 %v661, %v666
        %v668 = vadd.f32 %v647, %v667
        %669 = vset.pattern.permute.xlu0 1
        %670 = vperm.xlu0 %669, %v284
        %v671 = vpop.permute.xlu0 %670
        %v673 = vlaneseq
        %v674 = vshrl.u32 %v673, 7
        %v675 = vsub.s32 1, %v674
        %v676 = vrot.slane %v657, %v675
        %v677 = vmul.f32 %v671, %v676
        %v678 = vadd.f32 %v668, %v677
        %679 = vset.pattern.permute.xlu0 2
        %680 = vperm.xlu0 %679, %v284
        %v681 = vpop.permute.xlu0 %680
        %v683 = vlaneseq
        %v684 = vshrl.u32 %v683, 7
        %v685 = vsub.s32 2, %v684
        %v686 = vrot.slane %v657, %v685
        %v687 = vmul.f32 %v681, %v686
        %v688 = vadd.f32 %v678, %v687
        %689 = vset.pattern.permute.xlu0 3
        %690 = vperm.xlu0 %689, %v284
        %v691 = vpop.permute.xlu0 %690
        %v693 = vlaneseq
        %v694 = vshrl.u32 %v693, 7
        %v695 = vsub.s32 3, %v694
        %v696 = vrot.slane %v657, %v695
        %v697 = vmul.f32 %v691, %v696
        %v698 = vadd.f32 %v688, %v697
        %699 = vset.pattern.permute.xlu0 4
        %700 = vperm.xlu0 %699, %v284
        %v701 = vpop.permute.xlu0 %700
        %v703 = vlaneseq
        %v704 = vshrl.u32 %v703, 7
        %v705 = vsub.s32 4, %v704
        %v706 = vrot.slane %v657, %v705
        %v707 = vmul.f32 %v701, %v706
        %v708 = vadd.f32 %v698, %v707
        %709 = vset.pattern.permute.xlu0 5
        %710 = vperm.xlu0 %709, %v284
        %v711 = vpop.permute.xlu0 %710
        %v713 = vlaneseq
        %v714 = vshrl.u32 %v713, 7
        %v715 = vsub.s32 5, %v714
        %v716 = vrot.slane %v657, %v715
        %v717 = vmul.f32 %v711, %v716
        %v718 = vadd.f32 %v708, %v717
        %719 = vset.pattern.permute.xlu0 6
        %720 = vperm.xlu0 %719, %v284
        %v721 = vpop.permute.xlu0 %720
        %v723 = vlaneseq
        %v724 = vshrl.u32 %v723, 7
        %v725 = vsub.s32 6, %v724
        %v726 = vrot.slane %v657, %v725
        %v727 = vmul.f32 %v721, %v726
        %v728 = vadd.f32 %v718, %v727
        %729 = vset.pattern.permute.xlu0 7
        %730 = vperm.xlu0 %729, %v284
        %v731 = vpop.permute.xlu0 %730
        %v733 = vlaneseq
        %v734 = vshrl.u32 %v733, 7
        %v735 = vsub.s32 7, %v734
        %v736 = vrot.slane %v657, %v735
        %v737 = vmul.f32 %v731, %v736
        %v738 = vadd.f32 %v728, %v737
        %vm739 = vcmask 130048
        %v740 = vsel %vm739, %v738, 0.0
        %741 = vadd.xlane.f32.xlu0 %v740
        %v742 = vpop.xlane.xlu0 %741
        %v743 = vmul.f32 %v738, %v738
        %v744 = vsel %vm739, %v743, 0.0
        %745 = vadd.xlane.f32.xlu0 %v744
        %v746 = vpop.xlane.xlu0 %745
        %v747 = vld [vmem:[%s267] sm:$0xff]
        %vm748 = vcmask 7168
        %v749 = vsel %vm748, %v742, %v746
        %v750 = vadd.f32 %v747, %v749
        %vm751 = vcmask 15360
        %752 = vst.msk [vmem:[%s267] sm:$0xff] %vm751, %v750
        %s753 = sand.u32 %s131, 1
        %s754 = scalar_lea.sflag [#allocation4], %s753
        %s755 = sand.u32 %s131, 1
        %s756 = smul.addr %s755, 8
        %s757 = scalar_lea.vmem [#allocation8], %s756
        // Predicated region
        $region49: #{tpu_custom_call.1} parent=31 // pred_check
          %p758 = pneg %p141
        $region50: #{tpu_custom_call.1} parent=31 // pred_check_branch
          %760 = sbr.rel (%p758) target = $region52
        $region51: #{tpu_custom_call.1} parent=31 // pred_region
          %s762 = ssub.s32 128, 128
          %763 = vsyncadd %s754, %s762
          %s764 = smul.addr %s28, 128
          %s765 = scalar_lea.hbm %s3, %s764
          %s767 = sshll.u32 %s757, 4
          %s768 = int_to_ptr.vmem [resolvable:$true] %s767
          %770 = dma.vmem_to_hbm [thread:$0]  %s768, 128, %s765, %s754
        $region52: #{tpu_custom_call.1} parent=31 // pred_fallthru
          _
      $region32: #{tpu_custom_call.1} parent=5 // pred_fallthru
        _
      %p771 = scmp.le.s32.totalorder 2, %s18
      // Predicated region
      $region53: #{tpu_custom_call.1} parent=5 // pred_check
        %p772 = pneg %p771
      $region54: #{tpu_custom_call.1} parent=5 // pred_check_branch
        %774 = sbr.rel (%p772) target = $region56
      $region55: #{tpu_custom_call.1} parent=5 // pred_region
        %s775 = ssub.s32 %s18, 2
        // Predicated region
        $region57: #{tpu_custom_call.1} parent=55 // pred_check
          %p776 = pneg %p147
        $region58: #{tpu_custom_call.1} parent=55 // pred_check_branch
          %778 = sbr.rel (%p776) target = $region60
        $region59: #{tpu_custom_call.1} parent=55 // pred_region
          %s779 = sand.u32 %s132, 1
          %s780 = scalar_lea.sflag [#allocation4], %s779
          %s781 = sand.u32 %s132, 1
          %s782 = smul.addr %s781, 8
          %s783 = scalar_lea.vmem [#allocation8], %s782
          %784 = dma.done %s780, 128
        $region60: #{tpu_custom_call.1} parent=55 // pred_fallthru
          _
      $region56: #{tpu_custom_call.1} parent=5 // pred_fallthru
        _
    $region6: #{tpu_custom_call.1} parent=1 // loop_footer
      %s22 = sadd.s32 1, %s18
    $region7: #{tpu_custom_call.1} parent=1 // loop_footer_branch
      %17 = sbr.rel target = $region3
    $region8: #{tpu_custom_call.1} parent=1 // loop_exit
      _
    %785 = vsyncpa [#allocation3], 1
    %s786 = scalar_lea.sflag [#allocation3], 1
    %787 = vsyncpa %s786, 1
    %788 = vsyncpa [#allocation6], 1
    %s789 = scalar_lea.sflag [#allocation6], 1
    %790 = vsyncpa %s789, 1
    %791 = vsyncpa [#allocation4], 1
    %s792 = scalar_lea.sflag [#allocation4], 1
    %793 = vsyncpa %s792, 1

</llo_original>
